<compile_context>
chip_gen: v7x
topology: tpu7x:2x2x1
jax: 0.10.0
libtpu: 0.0.40
codegen_flags: <defaults>
</compile_context>

<pallas_src>
from functools import partial

import jax
import jax.numpy as jnp
from jax.experimental import pallas as pl
from jax.experimental.pallas import tpu as pltpu


def pc_kernel(x_ref, w_ref, b_ref, o_ref):
    # x_ref : (4*Ci, Tt) bf16  stride-2 taps [s0; s1; s2; s3] of one batch element
    # w_ref : (2*Co, 4*Ci) bf16  banded conv weight [[W0 W1 W2 0], [0 W0 W1 W2]]
    # b_ref : (2*Co, 1) f32      conv bias duplicated for the even/odd halves
    # o_ref : (Co, T) f32        pooled output, already in PyTorch (Co, T) layout
    #
    # One MXU push: even- and odd-position conv outputs for all T+1 phase columns.
    z = jnp.dot(w_ref[...], x_ref[...], preferred_element_type=jnp.float32)  # (2Co, Tt) f32

    # Bias + ReLU fused, f32 on the VPU (v5e-safe).
    r = jnp.maximum(z + b_ref[...], 0.0)

    co, t_out = o_ref.shape
    s = r[:co, :] + r[co:, :]            # relu(z[2t]) + relu(z[2t+1])      (Co, Tt)

    # AvgPool window of 4 = s[t] + s[t+1]; the t+1 term is a static 1-lane
    # shift of an in-register value (single XLU lane rotate, no concat copy).
    o_ref[...] = (0.25 * (s[:, :t_out] + s[:, 1:t_out + 1])).astype(o_ref.dtype)

    # TODO(synk): training-mode Dropout (pltpu.prng_seed + prng_random_bits mask)
    # omitted; this matches eval-mode semantics (dropout = identity).


@partial(jax.jit, static_argnums=(3,))
def pc_module_forward(x, weight, bias, padding_size):
    """x: (N, Ci, L) f32, weight: (Co, Ci, 3), bias: (Co,) — PyTorch Conv1d layout."""
    N, Ci, L = x.shape
    Co = weight.shape[0]
    Lpad = L + 2 * padding_size
    Lout = Lpad - 2                       # Conv1d(k=3, stride=1) output length
    assert Lout >= 4, "sequence too short for AvgPool1d(kernel_size=4)"
    T = (Lout - 4) // 2 + 1               # AvgPool1d(4, stride=2) output length
    Tt = T + 1                            # phase length: T real columns + 1 lookahead

    # ---- wrapper-side layout plumbing (fused XLA glue) -----------------------
    x_pad = jnp.pad(x, ((0, 0), (0, 0), (padding_size, padding_size)))

    # stride-2 tap views: s_k[n, ci, t] = x_pad[n, ci, 2t + k],  k = 0..3
    taps = [x_pad[:, :, k:k + 2 * Tt - 1:2] for k in range(4)]   # each (N, Ci, Tt)
    xb = jnp.concatenate(taps, axis=1).astype(jnp.bfloat16)      # (N, 4*Ci, Tt)

    # weight (Co, Ci, 3) -> (2*Co, 4*Ci) banded form (no zero block-diagonal rows)
    W0, W1, W2 = weight[:, :, 0], weight[:, :, 1], weight[:, :, 2]
    Z = jnp.zeros_like(W0)
    wblk = jnp.concatenate(
        [jnp.concatenate([W0, W1, W2, Z], axis=1),
         jnp.concatenate([Z, W0, W1, W2], axis=1)],
        axis=0).astype(jnp.bfloat16)                             # (2*Co, 4*Ci)

    b2 = jnp.concatenate([bias, bias]).reshape(2 * Co, 1).astype(jnp.float32)

    # ---- Pallas call: grid over batch, output written directly as (N, Co, T) ----
    out = pl.pallas_call(
        pc_kernel,
        out_shape=jax.ShapeDtypeStruct((N, Co, T), jnp.float32),
        grid_spec=pltpu.PrefetchScalarGridSpec(
            num_scalar_prefetch=0,
            grid=(N,),
            in_specs=[
                pl.BlockSpec((None, 4 * Ci, Tt), lambda n: (n, 0, 0)),
                pl.BlockSpec((2 * Co, 4 * Ci), lambda n: (0, 0)),
                pl.BlockSpec((2 * Co, 1), lambda n: (0, 0)),
            ],
            out_specs=pl.BlockSpec((None, Co, T), lambda n: (n, 0, 0)),
        ),
        compiler_params=pltpu.CompilerParams(
            dimension_semantics=("parallel",)),
    )(xb, wblk, b2)
    return out                                                    # (N, Co, T)


def ref_forward(x, weight, bias, padding_size):
    """Pure-JAX reference (Conv1d -> ReLU -> AvgPool1d(4,2)) for the correctness check."""
    out = jax.lax.conv_general_dilated(
        x, weight, window_strides=(1,),
        padding=[(padding_size, padding_size)],
        dimension_numbers=("NCH", "OIH", "NCH"))
    out = out + bias[None, :, None]
    out = jnp.maximum(out, 0.0)
    T = (out.shape[-1] - 4) // 2 + 1
    pooled = jnp.stack(
        [out[..., 2 * t:2 * t + 4].mean(-1) for t in range(T)], axis=-1)
    return pooled


if __name__ == "__main__":
    # args.input_dim=4, args.kernel_num=8, args.padding_size=1, batch=2, seq=16
    N, Ci, Co, L, P = 2, 4, 8, 16, 1

    key = jax.random.PRNGKey(0)
    kx, kw, kb = jax.random.split(key, 3)
    x = jax.random.normal(kx, (N, Ci, L), dtype=jnp.float32)
    fan_in = Ci * 3
    bound = 1.0 / (fan_in ** 0.5)
    weight = jax.random.uniform(kw, (Co, Ci, 3), jnp.float32, -bound, bound)
    bias = jax.random.uniform(kb, (Co,), jnp.float32, -bound, bound)

    out = jax.block_until_ready(pc_module_forward(x, weight, bias, P))

    # Kernel feeds bf16 x / weight to the MXU with f32 accumulation; compare
    # against the f32 reference evaluated on the same bf16-rounded inputs.
    x_r = x.astype(jnp.bfloat16).astype(jnp.float32)
    w_r = weight.astype(jnp.bfloat16).astype(jnp.float32)
    ref = jax.block_until_ready(ref_forward(x_r, w_r, bias, P))

    assert out.shape == ref.shape, (out.shape, ref.shape)
    assert jnp.allclose(out, ref, atol=1e-4, rtol=1e-4), "mismatch vs reference"

    print("KERNEL_OK")
</pallas_src>

<mosaic_0001>
module attributes {stable_mosaic.version = 11 : i64} {
  func.func @pc_kernel(%arg0: i32, %arg1: memref<1x16x8xbf16, #tpu.memory_space<vmem>>, %arg2: memref<16x16xbf16, #tpu.memory_space<vmem>>, %arg3: memref<16x1xf32, #tpu.memory_space<vmem>>, %arg4: memref<1x8x7xf32, #tpu.memory_space<vmem>>) attributes {dimension_semantics = [#tpu.dimension_semantics<parallel>], iteration_bounds = array<i64: 2>, scalar_prefetch = 0 : i64, scratch_operands = 0 : i64, tpu.core_type = #tpu.core_type<tc>, window_params = [{transform_indices = @transform_0, window_bounds = array<i64: 1, 16, 8>}, {pipeline_mode = #tpu.pipeline_mode<synchronous>, transform_indices = @transform_1, window_bounds = array<i64: 16, 16>}, {pipeline_mode = #tpu.pipeline_mode<synchronous>, transform_indices = @transform_2, window_bounds = array<i64: 16, 1>}, {transform_indices = @transform_3, window_bounds = array<i64: 1, 8, 7>}]} {
    %c0 = arith.constant 0 : index
    %c0_0 = arith.constant 0 : index
    %0 = vector.load %arg2[%c0, %c0_0] : memref<16x16xbf16, #tpu.memory_space<vmem>>, vector<16x16xbf16>
    %c0_1 = arith.constant 0 : index
    %c0_2 = arith.constant 0 : index
    %c0_3 = arith.constant 0 : index
    %1 = vector.load %arg1[%c0_1, %c0_2, %c0_3] : memref<1x16x8xbf16, #tpu.memory_space<vmem>>, vector<1x16x8xbf16>
    %2 = vector.shape_cast %1 : vector<1x16x8xbf16> to vector<16x8xbf16>
    %cst = arith.constant dense<0.000000e+00> : vector<16x8xf32>
    %3 = tpu.matmul %0, %2, %cst {dimension_numbers = #tpu.dot_dimension_numbers<[1], [0], [0], [1], [0, 0, 1, 1], [], []>} : vector<16x16xbf16>, vector<16x8xbf16>, vector<16x8xf32> -> vector<16x8xf32>
    %c0_4 = arith.constant 0 : index
    %c0_5 = arith.constant 0 : index
    %4 = vector.load %arg3[%c0_4, %c0_5] : memref<16x1xf32, #tpu.memory_space<vmem>>, vector<16x1xf32>
    %5 = vector.broadcast %4 : vector<16x1xf32> to vector<16x8xf32>
    %6 = arith.addf %3, %5 : vector<16x8xf32>
    %cst_6 = arith.constant 0.000000e+00 : f32
    %7 = vector.broadcast %cst_6 : f32 to vector<16x8xf32>
    %8 = arith.maximumf %6, %7 : vector<16x8xf32>
    %9 = vector.extract_strided_slice %8 {offsets = [0, 0], sizes = [8, 8], strides = [1, 1]} : vector<16x8xf32> to vector<8x8xf32>
    %10 = vector.extract_strided_slice %8 {offsets = [8, 0], sizes = [8, 8], strides = [1, 1]} : vector<16x8xf32> to vector<8x8xf32>
    %11 = arith.addf %9, %10 : vector<8x8xf32>
    %12 = vector.extract_strided_slice %11 {offsets = [0, 0], sizes = [8, 7], strides = [1, 1]} : vector<8x8xf32> to vector<8x7xf32>
    %13 = vector.extract_strided_slice %11 {offsets = [0, 1], sizes = [8, 7], strides = [1, 1]} : vector<8x8xf32> to vector<8x7xf32>
    %14 = arith.addf %12, %13 : vector<8x7xf32>
    %cst_7 = arith.constant 2.500000e-01 : f32
    %15 = vector.broadcast %cst_7 : f32 to vector<8x7xf32>
    %16 = arith.mulf %15, %14 : vector<8x7xf32>
    %c0_8 = arith.constant 0 : index
    %c0_9 = arith.constant 0 : index
    %c0_10 = arith.constant 0 : index
    %17 = vector.load %arg4[%c0_8, %c0_9, %c0_10] : memref<1x8x7xf32, #tpu.memory_space<vmem>>, vector<1x8x7xf32>
    %18 = vector.shape_cast %17 : vector<1x8x7xf32> to vector<8x7xf32>
    %19 = vector.shape_cast %16 : vector<8x7xf32> to vector<1x8x7xf32>
    tpu.vector_store %arg4[%c0_8, %c0_9, %c0_10], %19 {strides = array<i32>} : memref<1x8x7xf32, #tpu.memory_space<vmem>>, vector<1x8x7xf32>,
    return
  }
  func.func @transform_0(%arg0: i32) -> (i32, i32, i32) {
    %c0_i32 = arith.constant 0 : i32
    %c0_i32_0 = arith.constant 0 : i32
    %c0_i32_1 = arith.constant 0 : i32
    return %arg0, %c0_i32, %c0_i32_0 : i32, i32, i32
  }
  func.func @transform_1(%arg0: i32) -> (i32, i32) {
    %c0_i32 = arith.constant 0 : i32
    %c0_i32_0 = arith.constant 0 : i32
    %c0_i32_1 = arith.constant 0 : i32
    return %c0_i32, %c0_i32_0 : i32, i32
  }
  func.func @transform_2(%arg0: i32) -> (i32, i32) {
    %c0_i32 = arith.constant 0 : i32
    %c0_i32_0 = arith.constant 0 : i32
    %c0_i32_1 = arith.constant 0 : i32
    return %c0_i32, %c0_i32_0 : i32, i32
  }
  func.func @transform_3(%arg0: i32) -> (i32, i32, i32) {
    %c0_i32 = arith.constant 0 : i32
    %c0_i32_0 = arith.constant 0 : i32
    %c0_i32_1 = arith.constant 0 : i32
    return %arg0, %c0_i32, %c0_i32_0 : i32, i32, i32
  }
}

</mosaic_0001>

<llo_original>
// kernel: pc_module_forward.1
$region0: #{pc_module_forward.1}
  #allocation0 [shape = 'u32[]', space=smem, size = 0x4, offset = 0x4, fixed_abs, tag = 'smem constant byte address 0x4 - core index']
  #allocation1 [shape = 'u32[144,128]{1,0:T(1,128)}', space=vmem, size = 0x12000, scoped, tag = 'internal scratch']
  %s0 = inlined_call_operand.vmem [shape: bf16[2,16,8], index: 0, kind: input, shape index: {}]
  %s1 = inlined_call_operand.vmem [shape: bf16[16,16], index: 1, kind: input, shape index: {}]
  %s2 = inlined_call_operand.vmem [shape: f32[16,1], index: 2, kind: input, shape index: {}]
  %s3 = inlined_call_operand.vmem [shape: f32[2,8,7], index: 3, kind: output, shape index: {}]
  %s4 = sld [smem:[#allocation0]]
  $region45: #{pc_module_forward.1} parent=0
    _
  %s6 = ssub.s32 1, %s4
  %s7 = scalar_select 0, %s6, %s4
  loop: start=0, step=1, limit=4
  $region2: #{pc_module_forward.1} parent=0 // loop_pre_header
    _
  $region3: #{pc_module_forward.1} parent=0 // loop_header
    %s9 = sphi 0, %s13
    %p10 = scmp.ge.s32.totalorder %s9, 4
    %s19 = sphi 0, %s21
    %s22 = sphi 0, %s19
    %s23 = sphi 0, %s22
    %s39 = sphi 0, %s23
    %s43 = sphi 0, %s43
    %s45 = sphi 0, %s43
    %s46 = sphi 0, %s45
    %s60 = sphi 0, %s46
    %s64 = sphi 0, %s64
    %s66 = sphi 0, %s64
    %s67 = sphi 0, %s66
    %s81 = sphi 0, %s67
    %s87 = sphi 0, %s89
    %s90 = sphi 0, %s87
    %s91 = sphi 0, %s90
    %s107 = sphi 0, %s91
  $region4: #{pc_module_forward.1} parent=0 // loop_header_branch
    %12 = sbr.rel (%p10) target = $region8
  $region5: #{pc_module_forward.1} parent=0 // loop_body
    %s14 = ssub.s32 %s9, 1
    %s15 = ssub.s32 %s9, 2
    %s16 = sadd.s32 %s9, 1
    %s17 = ssub.s32 %s9, %s16
    %p18 = scmp.eq.s32.totalorder %s17, 0
    %s20 = sadd.s32 %s19, 1
    %s21 = scalar_select %p18, %s19, %s20
    %p24 = pneg %p18
    %p25 = scmp.eq.s32.totalorder %s9, 1
    %p26 = por %p24, %p25
    %p27 = scmp.ne.s32.totalorder %s19, %s22
    %p28 = scmp.eq.s32.totalorder %s9, 0
    %p29 = por %p27, %p28
    %p30 = scmp.ne.s32.totalorder %s19, %s22
    %p31 = scmp.eq.s32.totalorder %s14, 1
    %p32 = por %p30, %p31
    %p33 = scmp.ne.s32.totalorder %s22, %s23
    %p34 = scmp.eq.s32.totalorder %s14, 0
    %p35 = por %p33, %p34
    %p36 = scmp.ne.s32.totalorder %s22, %s23
    %p37 = scmp.eq.s32.totalorder %s15, 1
    %p38 = por %p36, %p37
    %p40 = scmp.ne.s32.totalorder %s23, %s39
    %p41 = scmp.eq.s32.totalorder %s15, 0
    %p42 = por %p40, %p41
    %s44 = sadd.s32 %s43, 1
    %p47 = scmp.eq.s32.totalorder %s9, 1
    %p48 = scmp.ne.s32.totalorder %s43, %s45
    %p49 = scmp.eq.s32.totalorder %s9, 0
    %p50 = por %p48, %p49
    %p51 = scmp.ne.s32.totalorder %s43, %s45
    %p52 = scmp.eq.s32.totalorder %s14, 1
    %p53 = por %p51, %p52
    %p54 = scmp.ne.s32.totalorder %s45, %s46
    %p55 = scmp.eq.s32.totalorder %s14, 0
    %p56 = por %p54, %p55
    %p57 = scmp.ne.s32.totalorder %s45, %s46
    %p58 = scmp.eq.s32.totalorder %s15, 1
    %p59 = por %p57, %p58
    %p61 = scmp.ne.s32.totalorder %s46, %s60
    %p62 = scmp.eq.s32.totalorder %s15, 0
    %p63 = por %p61, %p62
    %s65 = sadd.s32 %s64, 1
    %p68 = scmp.eq.s32.totalorder %s9, 1
    %p69 = scmp.ne.s32.totalorder %s64, %s66
    %p70 = scmp.eq.s32.totalorder %s9, 0
    %p71 = por %p69, %p70
    %p72 = scmp.ne.s32.totalorder %s64, %s66
    %p73 = scmp.eq.s32.totalorder %s14, 1
    %p74 = por %p72, %p73
    %p75 = scmp.ne.s32.totalorder %s66, %s67
    %p76 = scmp.eq.s32.totalorder %s14, 0
    %p77 = por %p75, %p76
    %p78 = scmp.ne.s32.totalorder %s66, %s67
    %p79 = scmp.eq.s32.totalorder %s15, 1
    %p80 = por %p78, %p79
    %p82 = scmp.ne.s32.totalorder %s67, %s81
    %p83 = scmp.eq.s32.totalorder %s15, 0
    %p84 = por %p82, %p83
    %s85 = ssub.s32 %s9, %s16
    %p86 = scmp.eq.s32.totalorder %s85, 0
    %s88 = sadd.s32 %s87, 1
    %s89 = scalar_select %p86, %s87, %s88
    %p92 = pneg %p86
    %p93 = scmp.eq.s32.totalorder %s9, 1
    %p94 = por %p92, %p93
    %p95 = scmp.ne.s32.totalorder %s87, %s90
    %p96 = scmp.eq.s32.totalorder %s9, 0
    %p97 = por %p95, %p96
    %p98 = scmp.ne.s32.totalorder %s87, %s90
    %p99 = scmp.eq.s32.totalorder %s14, 1
    %p100 = por %p98, %p99
    %p101 = scmp.ne.s32.totalorder %s90, %s91
    %p102 = scmp.eq.s32.totalorder %s14, 0
    %p103 = por %p101, %p102
    %p104 = scmp.ne.s32.totalorder %s90, %s91
    %p105 = scmp.eq.s32.totalorder %s15, 1
    %p106 = por %p104, %p105
    %p108 = scmp.ne.s32.totalorder %s91, %s107
    %p109 = scmp.eq.s32.totalorder %s15, 0
    %p110 = por %p108, %p109
    %p111 = scmp.le.s32.totalorder 1, %s9
    %p112 = scmp.lt.s32.totalorder %s9, 3
    %p113 = pnand %p111, %p112
    %p114 = pneg %p113
    // Predicated region
    $region9: #{pc_module_forward.1} parent=5 // pred_check
      _
    $region10: #{pc_module_forward.1} parent=5 // pred_check_branch
      %116 = sbr.rel (%p113) target = $region12
    $region11: #{pc_module_forward.1} parent=5 // pred_region
      %s117 = ssub.s32 %s9, 1
      // Predicated region
      $region13: #{pc_module_forward.1} parent=11 // pred_check
        %p118 = pneg %p56
      $region14: #{pc_module_forward.1} parent=11 // pred_check_branch
        %120 = sbr.rel (%p118) target = $region16
      $region15: #{pc_module_forward.1} parent=11 // pred_region
        _
      $region16: #{pc_module_forward.1} parent=11 // pred_fallthru
        _
      // Predicated region
      $region17: #{pc_module_forward.1} parent=11 // pred_check
        %p121 = pneg %p77
      $region18: #{pc_module_forward.1} parent=11 // pred_check_branch
        %123 = sbr.rel (%p121) target = $region20
      $region19: #{pc_module_forward.1} parent=11 // pred_region
        _
      $region20: #{pc_module_forward.1} parent=11 // pred_fallthru
        _
    $region12: #{pc_module_forward.1} parent=5 // pred_fallthru
      _
    %p124 = scmp.lt.s32.totalorder %s9, 2
    // Predicated region
    $region21: #{pc_module_forward.1} parent=5 // pred_check
      %p125 = pneg %p124
    $region22: #{pc_module_forward.1} parent=5 // pred_check_branch
      %127 = sbr.rel (%p125) target = $region24
    $region23: #{pc_module_forward.1} parent=5 // pred_region
      // Predicated region
      $region25: #{pc_module_forward.1} parent=23 // pred_check
        %p128 = pneg %p29
      $region26: #{pc_module_forward.1} parent=23 // pred_check_branch
        %130 = sbr.rel (%p128) target = $region28
      $region27: #{pc_module_forward.1} parent=23 // pred_region
        %p131 = scmp.lt.s32.totalorder %s9, 1
        %s132 = scalar_select %p131, %s9, 1
        %s133 = smul.addr %s132, 2
        %s134 = smul.addr %s133, 4
        %s135 = scalar_lea.vmem %s0, %s134
      $region28: #{pc_module_forward.1} parent=23 // pred_fallthru
        _
    $region24: #{pc_module_forward.1} parent=5 // pred_fallthru
      _
    %p136 = scmp.le.s32.totalorder 1, %s9
    %p137 = scmp.lt.s32.totalorder %s9, 3
    %p138 = pnand %p136, %p137
    %p139 = pneg %p138
    // Predicated region
    $region29: #{pc_module_forward.1} parent=5 // pred_check
      _
    $region30: #{pc_module_forward.1} parent=5 // pred_check_branch
      %141 = sbr.rel (%p138) target = $region32
    $region31: #{pc_module_forward.1} parent=5 // pred_region
      %s142 = ssub.s32 %s9, 1
      %p143 = scmp.lt.s32.totalorder %s14, 1
      %s144 = scalar_select %p143, %s14, 1
      %s145 = smul.addr %s144, 2
      %s146 = smul.addr %s145, 4
      %s147 = scalar_lea.vmem %s0, %s146
      %p148 = pneg %p35
      %p149 = pneg %p32
      %p150 = pneg %p56
      %p151 = pneg %p53
      %p152 = pneg %p77
      %p153 = pneg %p74
      %p154 = pneg %p103
      %p155 = pneg %p100
      %p156 = scmp.lt.s32.totalorder %s14, 1
      %s157 = scalar_select %p156, %s14, 1
      %s158 = smul.addr %s157, 8
      %s159 = scalar_lea.vmem %s3, %s158
      %p160 = scmp.lt.s32.totalorder %s14, 1
      %s161 = scalar_select %p160, %s14, 1
      %s162 = smul.addr %s161, 2
      %s163 = smul.addr %s162, 4
      %s164 = scalar_lea.vmem %s0, %s163
      %p165 = scmp.lt.s32.totalorder %s14, 1
      %s166 = scalar_select %p165, %s14, 1
      %s167 = smul.addr %s166, 8
      %s168 = scalar_lea.vmem %s3, %s167
      %v170 = vld [vmem:[%s1] sm:$0xf]
      %v171 = vld [vmem:[%s1 + $0x4] sm:$0xf]
      %v172 = vld [vmem:[%s164] sm:$0xf]
      %v173 = vld [vmem:[%s164 + $0x4] sm:$0xf]
      %v174 = vld [vmem:[%s2] sm:$0xff]
      %v175 = vld [vmem:[%s2 + $0x8] sm:$0xff]
      %177 = vset.pattern.permute.xlu0 0
      %178 = vperm.xlu0 %177, %v174
      %v179 = vpop.permute.xlu0 %178
      %182 = vset.pattern.permute.xlu0 0
      %183 = vperm.xlu0 %182, %v175
      %v184 = vpop.permute.xlu0 %183
      %v188 = vunpack.c.l.b16 %v170
      %v189 = vunpack.c.l.b16 %v171
      %v190 = vpack.c.b16 %v189, %v188
      %v193 = vunpack.c.l.b16 %v172
      %v194 = vunpack.c.l.b16 %v173
      %v195 = vpack.c.b16 %v194, %v193
      %vm197 = vcmask 130048
      %v199 = vsel %vm197, %v190, 0
      %201 = vmatprep.subr.bf16.mxu0 0
      %202 = vmatpush1.bf16.msra.mxu0 %v195
      %203 = vmatprep.subr.bf16.mxu0 0
      %204 = vmatpush1.bf16.msra.mxu0 0
      %205 = vmatprep.subr.bf16.mxu0 0
      %206 = vmatpush1.bf16.msra.mxu0 0
      %207 = vmatprep.subr.bf16.mxu0 0
      %208 = vmatpush1.bf16.msra.mxu0 0
      %209 = vmatprep.subr.bf16.mxu0 0
      %210 = vmatpush1.bf16.msra.mxu0 0
      %211 = vmatprep.subr.bf16.mxu0 0
      %212 = vmatpush1.bf16.msra.mxu0 0
      %213 = vmatprep.subr.bf16.mxu0 0
      %214 = vmatpush1.bf16.msra.mxu0 0
      %215 = vmatprep.subr.bf16.mxu0 0
      %216 = vmatpush1.bf16.msra.mxu0 0
      %217 = vmatprep.subr.bf16.mxu0 0
      %218 = vmatpush1.bf16.msra.mxu0 0
      %219 = vmatprep.subr.bf16.mxu0 0
      %220 = vmatpush1.bf16.msra.mxu0 0
      %221 = vmatprep.subr.bf16.mxu0 0
      %222 = vmatpush1.bf16.msra.mxu0 0
      %223 = vmatprep.subr.bf16.mxu0 0
      %224 = vmatpush1.bf16.msra.mxu0 0
      %225 = vmatprep.subr.bf16.mxu0 0
      %226 = vmatpush1.bf16.msra.mxu0 0
      %227 = vmatprep.subr.bf16.mxu0 0
      %228 = vmatpush1.bf16.msra.mxu0 0
      %229 = vmatprep.subr.bf16.mxu0 0
      %230 = vmatpush1.bf16.msra.mxu0 0
      %231 = vmatprep.subr.bf16.mxu0 0
      %232 = vmatpush1.bf16.msra.mxu0 0
      %233 = vmatprep.mubr.bf16.mxu0 0
      %234 = vmatmul.mubr.bf16.gmra.mrb[0].mxu0 %v199
      %v235 = vpop.f32.mrb[0].mxu0
      %v236 = vadd.f32 %v179, %v235
      %v237 = vpop.f32.mrb[0].mxu0
      %v238 = vpop.f32.mrb[0].mxu0
      %v239 = vadd.f32 %v184, %v238
      %v240 = vpop.f32.mrb[0].mxu0
      %241 = vdwg.mxu0
      %v242 = vmax.f32 %v236, 0.0
      %v243 = vmax.f32 %v239, 0.0
      %v244 = vadd.f32 %v242, %v243
      %246 = vrot.lane.b32.xlu0 %v244, 127
      %v247 = vpop.permute.xlu0 %246
      %v249 = vadd.f32 %v244, %v247
      %v250 = vmul.f32 %v249, 0.25
      %vm251 = vcmask 56320
      %252 = vst.msk [vmem:[%s168] sm:$0xff] %vm251, %v250
      %p253 = scmp.lt.s32.totalorder %s14, 1
      %s254 = scalar_select %p253, %s14, 1
      %s255 = smul.addr %s254, 8
      %s256 = scalar_lea.vmem %s3, %s255
      // Predicated region
      $region33: #{pc_module_forward.1} parent=31 // pred_check
        %p257 = pneg %p100
      $region34: #{pc_module_forward.1} parent=31 // pred_check_branch
        %259 = sbr.rel (%p257) target = $region36
      $region35: #{pc_module_forward.1} parent=31 // pred_region
        _
      $region36: #{pc_module_forward.1} parent=31 // pred_fallthru
        _
    $region32: #{pc_module_forward.1} parent=5 // pred_fallthru
      _
    %p260 = scmp.le.s32.totalorder 2, %s9
    // Predicated region
    $region37: #{pc_module_forward.1} parent=5 // pred_check
      %p261 = pneg %p260
    $region38: #{pc_module_forward.1} parent=5 // pred_check_branch
      %263 = sbr.rel (%p261) target = $region40
    $region39: #{pc_module_forward.1} parent=5 // pred_region
      %s264 = ssub.s32 %s9, 2
      // Predicated region
      $region41: #{pc_module_forward.1} parent=39 // pred_check
        %p265 = pneg %p106
      $region42: #{pc_module_forward.1} parent=39 // pred_check_branch
        %267 = sbr.rel (%p265) target = $region44
      $region43: #{pc_module_forward.1} parent=39 // pred_region
        %p268 = scmp.lt.s32.totalorder %s15, 1
        %s269 = scalar_select %p268, %s15, 1
        %s270 = smul.addr %s269, 8
        %s271 = scalar_lea.vmem %s3, %s270
      $region44: #{pc_module_forward.1} parent=39 // pred_fallthru
        _
    $region40: #{pc_module_forward.1} parent=5 // pred_fallthru
      _
  $region6: #{pc_module_forward.1} parent=0 // loop_footer
    %s13 = sadd.s32 1, %s9
  $region7: #{pc_module_forward.1} parent=0 // loop_footer_branch
    %8 = sbr.rel target = $region3
  $region8: #{pc_module_forward.1} parent=0 // loop_exit
    _

</llo_original>
